<compile_context>
chip_gen: v7x
topology: tpu7x:2x2x1
jax: 0.10.0
libtpu: 0.0.40
codegen_flags: <defaults>
</compile_context>

<pallas_src>
import functools

import jax
import jax.numpy as jnp
from jax import lax
from jax.experimental import pallas as pl
from jax.experimental.pallas import tpu as pltpu


def _dropout_kernel(seed_ref, x_ref, o_ref, *, keep_thresh: int, inv_keep: float,
                    tile_rows: int, width: int):
    # Global linear element index of every element in this block (so each grid
    # step -- and each megacore shard -- gets distinct, deterministic bits).
    row_start = pl.program_id(0) * tile_rows
    rows = lax.broadcasted_iota(jnp.int32, (tile_rows, width), 0)
    cols = lax.broadcasted_iota(jnp.int32, (tile_rows, width), 1)
    gidx = ((row_start + rows) * width + cols).astype(jnp.uint32)

    # Counter-based hash (murmur3 fmix32) of (index, seed) -> uniform u32 bits.
    seed = seed_ref[0].astype(jnp.uint32)
    h = (gidx * jnp.uint32(0x9E3779B9)
         + seed * jnp.uint32(0x85EBCA6B)
         + jnp.uint32(0x27D4EB2F))
    h = h ^ (h >> jnp.uint32(16))
    h = h * jnp.uint32(0x85EBCA6B)
    h = h ^ (h >> jnp.uint32(13))
    h = h * jnp.uint32(0xC2B2AE35)
    h = h ^ (h >> jnp.uint32(16))

    # Bernoulli(keep_prob) via exact (2^-32 resolution) unsigned threshold,
    # fused with the inverted-dropout scale; compute in f32, cast once at store.
    keep = h < jnp.uint32(keep_thresh)
    xv = x_ref[...].astype(jnp.float32)
    o_ref[...] = jnp.where(keep, xv * jnp.float32(inv_keep),
                           jnp.float32(0.0)).astype(o_ref.dtype)


# ~2 MiB per block: with double-buffered input + output that's ~8 MiB of VMEM,
# safe on v7x (64 MiB VMEM / 32 MiB scoped default) and large enough to sit at
# the HBM roofline on v5e/v6e.
_TARGET_BLOCK_BYTES = 2 * 1024 * 1024


def my_dropout(x, *, p: float = 0.5, seed: int = 0, training: bool = True):
    """Pallas TPU dropout matching MyDropout.forward."""
    if p < 0.0 or p > 1.0:
        raise ValueError(
            "dropout probability has to be between 0 and 1, but got {}".format(p))
    if not training or p == 0.0:
        return x
    # TODO(synk): p == 1.0 divides by zero exactly like the PyTorch reference
    # (1.0 / (1 - p)); not handled specially.

    keep_prob = 1.0 - p
    inv_keep = 1.0 / keep_prob
    keep_thresh = min(int(round(keep_prob * (1 << 32))), (1 << 32) - 1)

    orig_shape = x.shape
    total = x.size
    assert total % 128 == 0, "element count must be a multiple of 128 (lane width)"

    # Widest lane-dense layout that divides the element count: larger contiguous
    # DMA descriptors and unmasked vector stores.
    width = 128
    for cand in (1024, 512, 256, 128):
        if total % cand == 0:
            width = cand
            break
    rows = total // width
    flat = x.reshape(rows, width)

    # Row tile: ~_TARGET_BLOCK_BYTES per block, multiple of 8 (sublane) when
    # tiled; a single block equal to the full array is always legal.
    target_rows = max(8, _TARGET_BLOCK_BYTES // (width * flat.dtype.itemsize))
    target_rows = (target_rows // 8) * 8
    tile_rows = rows if rows <= target_rows else target_rows
    num_blocks = pl.cdiv(rows, tile_rows)

    seed_arr = jnp.array([seed], dtype=jnp.int32)

    kernel = functools.partial(
        _dropout_kernel, keep_thresh=keep_thresh, inv_keep=inv_keep,
        tile_rows=tile_rows, width=width)

    out_flat = pl.pallas_call(
        kernel,
        out_shape=jax.ShapeDtypeStruct(flat.shape, flat.dtype),
        grid=(num_blocks,),
        in_specs=[
            pl.BlockSpec(memory_space=pltpu.MemorySpace.SMEM),   # seed scalar
            pl.BlockSpec((tile_rows, width), lambda i: (i, 0)),  # x tile
        ],
        out_specs=pl.BlockSpec((tile_rows, width), lambda i: (i, 0)),
        compiler_params=pltpu.CompilerParams(
            dimension_semantics=("parallel",)),
    )(seed_arr, flat)

    return out_flat.reshape(orig_shape)


if __name__ == "__main__":
    key = jax.random.PRNGKey(0)
    # Small NCHW input consistent with a conv-style activation map.
    x = jax.random.normal(key, (2, 4, 16, 16), dtype=jnp.float32)

    p = 0.5
    y_train = my_dropout(x, p=p, seed=1234, training=True)
    y_train = jax.block_until_ready(y_train)

    # Eval mode is identity.
    y_eval = my_dropout(x, p=p, training=False)
    y_eval = jax.block_until_ready(y_eval)

    # Sanity checks: eval path is identity; training path elements are either
    # exactly 0 (dropped) or x * 1/(1-p) (kept).
    assert jnp.array_equal(y_eval, x)
    scale = 1.0 / (1.0 - p)
    kept = jnp.isclose(y_train, x * scale, rtol=1e-6, atol=1e-6)
    dropped = y_train == 0.0
    assert bool(jnp.all(kept | dropped))
    # With p=0.5 over 2048 elements, both outcomes should occur.
    assert bool(jnp.any(kept)) and bool(jnp.any(dropped))

    print("KERNEL_OK")
</pallas_src>

<mosaic_0001>
module attributes {stable_mosaic.version = 11 : i64} {
  func.func @_dropout_kernel(%arg0: i32, %arg1: memref<1xi32, #tpu.memory_space<smem>>, %arg2: memref<2x1024xf32, #tpu.memory_space<vmem>>, %arg3: memref<2x1024xf32, #tpu.memory_space<vmem>>) attributes {dimension_semantics = [#tpu.dimension_semantics<parallel>], iteration_bounds = array<i64: 1>, scalar_prefetch = 0 : i64, scratch_operands = 0 : i64, tpu.core_type = #tpu.core_type<tc>, window_params = [{transform_indices = @transform_0, window_bounds = array<i64: 1>}, {transform_indices = @transform_1, window_bounds = array<i64: 2, 1024>}, {transform_indices = @transform_2, window_bounds = array<i64: 2, 1024>}]} {
    %c2_i32 = arith.constant 2 : i32
    %0 = arith.muli %arg0, %c2_i32 : i32
    %1 = tpu.iota {dimensions = array<i32: 0>} : vector<2x1024xi32>
    %2 = tpu.iota {dimensions = array<i32: 1>} : vector<2x1024xi32>
    %3 = vector.broadcast %0 : i32 to vector<2x1024xi32>
    %4 = arith.addi %3, %1 : vector<2x1024xi32>
    %c1024_i32 = arith.constant 1024 : i32
    %5 = vector.broadcast %c1024_i32 : i32 to vector<2x1024xi32>
    %6 = arith.muli %4, %5 : vector<2x1024xi32>
    %7 = arith.addi %6, %2 : vector<2x1024xi32>
    %c0 = arith.constant 0 : index
    %8 = memref.load %arg1[%c0] : memref<1xi32, #tpu.memory_space<smem>>
    %c-1640531527_i32 = arith.constant -1640531527 : i32
    %9 = vector.broadcast %c-1640531527_i32 : i32 to vector<2x1024xi32>
    %10 = arith.muli %7, %9 : vector<2x1024xi32>
    %c-2048144789_i32 = arith.constant -2048144789 : i32
    %11 = arith.muli %8, %c-2048144789_i32 : i32
    %12 = vector.broadcast %11 : i32 to vector<2x1024xi32>
    %13 = arith.addi %10, %12 : vector<2x1024xi32>
    %c668265263_i32 = arith.constant 668265263 : i32
    %14 = vector.broadcast %c668265263_i32 : i32 to vector<2x1024xi32>
    %15 = arith.addi %13, %14 : vector<2x1024xi32>
    %c16_i32 = arith.constant 16 : i32
    %16 = vector.broadcast %c16_i32 : i32 to vector<2x1024xi32>
    %17 = arith.shrui %15, %16 : vector<2x1024xi32>
    %18 = arith.xori %15, %17 : vector<2x1024xi32>
    %c-2048144789_i32_0 = arith.constant -2048144789 : i32
    %19 = vector.broadcast %c-2048144789_i32_0 : i32 to vector<2x1024xi32>
    %20 = arith.muli %18, %19 : vector<2x1024xi32>
    %c13_i32 = arith.constant 13 : i32
    %21 = vector.broadcast %c13_i32 : i32 to vector<2x1024xi32>
    %22 = arith.shrui %20, %21 : vector<2x1024xi32>
    %23 = arith.xori %20, %22 : vector<2x1024xi32>
    %c-1028477387_i32 = arith.constant -1028477387 : i32
    %24 = vector.broadcast %c-1028477387_i32 : i32 to vector<2x1024xi32>
    %25 = arith.muli %23, %24 : vector<2x1024xi32>
    %c16_i32_1 = arith.constant 16 : i32
    %26 = vector.broadcast %c16_i32_1 : i32 to vector<2x1024xi32>
    %27 = arith.shrui %25, %26 : vector<2x1024xi32>
    %28 = arith.xori %25, %27 : vector<2x1024xi32>
    %c-2147483648_i32 = arith.constant -2147483648 : i32
    %29 = vector.broadcast %c-2147483648_i32 : i32 to vector<2x1024xi32>
    %30 = arith.cmpi ult, %28, %29 : vector<2x1024xi32>
    %c0_2 = arith.constant 0 : index
    %c0_3 = arith.constant 0 : index
    %31 = vector.load %arg2[%c0_2, %c0_3] : memref<2x1024xf32, #tpu.memory_space<vmem>>, vector<2x1024xf32>
    %cst = arith.constant 2.000000e+00 : f32
    %32 = vector.broadcast %cst : f32 to vector<2x1024xf32>
    %33 = arith.mulf %31, %32 : vector<2x1024xf32>
    %cst_4 = arith.constant 0.000000e+00 : f32
    %34 = vector.broadcast %cst_4 : f32 to vector<2x1024xf32>
    %35 = arith.select %30, %33, %34 : vector<2x1024xi1>, vector<2x1024xf32>
    %c0_5 = arith.constant 0 : index
    %c0_6 = arith.constant 0 : index
    %36 = vector.load %arg3[%c0_5, %c0_6] : memref<2x1024xf32, #tpu.memory_space<vmem>>, vector<2x1024xf32>
    tpu.vector_store %arg3[%c0_5, %c0_6], %35 {strides = array<i32>} : memref<2x1024xf32, #tpu.memory_space<vmem>>, vector<2x1024xf32>,
    return
  }
  func.func @transform_0(%arg0: i32) -> i32 {
    %c0_i32 = arith.constant 0 : i32
    %c0_i32_0 = arith.constant 0 : i32
    return %c0_i32 : i32
  }
  func.func @transform_1(%arg0: i32) -> (i32, i32) {
    %c0_i32 = arith.constant 0 : i32
    %c0_i32_0 = arith.constant 0 : i32
    return %arg0, %c0_i32 : i32, i32
  }
  func.func @transform_2(%arg0: i32) -> (i32, i32) {
    %c0_i32 = arith.constant 0 : i32
    %c0_i32_0 = arith.constant 0 : i32
    return %arg0, %c0_i32 : i32, i32
  }
}

</mosaic_0001>

<llo_original>
// kernel: tpu_custom_call.1
$region0: #{tpu_custom_call.1}
  #allocation0 [shape = 'u32[]', space=smem, size = 0x4, offset = 0x4, fixed_abs, tag = 'smem constant byte address 0x4 - core index']
  #allocation1 [shape = 'u32[144,128]{1,0:T(1,128)}', space=vmem, size = 0x12000, scoped, tag = 'internal scratch']
  #allocation2 [shape = 's32[1]{0:T(128)S(6)}', space=smem, size = 0x200, scoped, tag = 'scoped memory for tpu_custom_call.1']
  %s0 = inlined_call_operand.<no memory space> [shape: s32[1], index: 0, kind: input, shape index: {}]
  %s1 = inlined_call_operand.hbm [shape: f32[2,1024], index: 1, kind: input, shape index: {}]
  %s2 = inlined_call_operand.hbm [shape: f32[2,1024], index: 2, kind: output, shape index: {}]
  %s3 = sld [smem:[#allocation0]]
  $region22: #{tpu_custom_call.1} parent=0
    _
  %s5 = ssub.s32 1, %s3
  %s6 = scalar_select 0, %s5, %s3
  %7 = sst [smem:[#allocation2]] %s0
  $region1: #{tpu_custom_call.1} parent=0
    #allocation3 [shape = 'u8[8192]{0}', space=vmem, size = 0x2000, scoped, tag = 'input window, operand 1, single buffered']
    #allocation4 [shape = 's32[1]{0}', space=sflag, size = 0x4, scoped, tag = 'scoped memory for tpu_custom_call.1']
    #allocation5 [shape = 's32[1]{0}', space=sflag, size = 0x4, scoped, tag = 'scoped memory for tpu_custom_call.1']
    #allocation6 [shape = 'u8[8192]{0}', space=vmem, size = 0x2000, scoped, tag = 'output window, operand 0, single buffered']
    %8 = vsyncpa [#allocation4], 0
    %9 = vsyncpa [#allocation5], 0
    // Predicated region
    $region2: #{tpu_custom_call.1} parent=1 // pred_check
      _
    $region3: #{tpu_custom_call.1} parent=1 // pred_check_branch
      %11 = sbr.rel (0) target = $region5
    $region4: #{tpu_custom_call.1} parent=1 // pred_region
      _
    $region5: #{tpu_custom_call.1} parent=1 // pred_fallthru
      _
    // Predicated region
    $region6: #{tpu_custom_call.1} parent=1 // pred_check
      _
    $region7: #{tpu_custom_call.1} parent=1 // pred_check_branch
      %13 = sbr.rel (0) target = $region9
    $region8: #{tpu_custom_call.1} parent=1 // pred_region
      %s15 = ssub.s32 256, 256
      %16 = vsyncadd [#allocation4], %s15
      %s18 = sshll.u32 [#allocation3], 4
      %s19 = int_to_ptr.vmem [resolvable:$true] %s18
      %21 = dma.hbm_to_vmem [thread:$0]  %s1, 256, %s19, [#allocation4]
    $region9: #{tpu_custom_call.1} parent=1 // pred_fallthru
      _
    // Predicated region
    $region10: #{tpu_custom_call.1} parent=1 // pred_check
      _
    $region11: #{tpu_custom_call.1} parent=1 // pred_check_branch
      %23 = sbr.rel (0) target = $region13
    $region12: #{tpu_custom_call.1} parent=1 // pred_region
      %24 = dma.done [#allocation4], 256
    $region13: #{tpu_custom_call.1} parent=1 // pred_fallthru
      _
    %s25 = smul.u32 0, 2
    %v26 = vlaneseq
    %v27 = vshrl.u32 %v26, 7
    %v28 = vlaneseq
    %v29 = vand.u32 %v28, 127
    %v30 = vadd.s32 %v29, 128
    %v31 = vadd.s32 %v29, 256
    %v32 = vadd.s32 %v29, 384
    %v33 = vadd.s32 %v29, 512
    %v34 = vadd.s32 %v29, 640
    %v35 = vadd.s32 %v29, 768
    %v36 = vadd.s32 %v29, 896
    %v37 = vstv %s25
    %v38 = vadd.s32 %v37, %v27
    %v39 = vmul.u32 %v38, 1024
    %v40 = vadd.s32 %v39, %v29
    %v41 = vadd.s32 %v39, %v30
    %v42 = vadd.s32 %v39, %v31
    %v43 = vadd.s32 %v39, %v32
    %v44 = vadd.s32 %v39, %v33
    %v45 = vadd.s32 %v39, %v34
    %v46 = vadd.s32 %v39, %v35
    %v47 = vadd.s32 %v39, %v36
    %s48 = sld [smem:[#allocation2]]
    %v49 = vmul.u32 %v40, 2654435769
    %v50 = vmul.u32 %v41, 2654435769
    %v51 = vmul.u32 %v42, 2654435769
    %v52 = vmul.u32 %v43, 2654435769
    %v53 = vmul.u32 %v44, 2654435769
    %v54 = vmul.u32 %v45, 2654435769
    %v55 = vmul.u32 %v46, 2654435769
    %v56 = vmul.u32 %v47, 2654435769
    %s57 = smul.u32 %s48, 2246822507
    %v58 = vstv %s57
    %v59 = vadd.s32 %v49, %v58
    %v60 = vadd.s32 %v50, %v58
    %v61 = vadd.s32 %v51, %v58
    %v62 = vadd.s32 %v52, %v58
    %v63 = vadd.s32 %v53, %v58
    %v64 = vadd.s32 %v54, %v58
    %v65 = vadd.s32 %v55, %v58
    %v66 = vadd.s32 %v56, %v58
    %v67 = vadd.s32 %v59, 668265263
    %v68 = vadd.s32 %v60, 668265263
    %v69 = vadd.s32 %v61, 668265263
    %v70 = vadd.s32 %v62, 668265263
    %v71 = vadd.s32 %v63, 668265263
    %v72 = vadd.s32 %v64, 668265263
    %v73 = vadd.s32 %v65, 668265263
    %v74 = vadd.s32 %v66, 668265263
    %v75 = vshrl.u32 %v67, 16
    %v76 = vshrl.u32 %v68, 16
    %v77 = vshrl.u32 %v69, 16
    %v78 = vshrl.u32 %v70, 16
    %v79 = vshrl.u32 %v71, 16
    %v80 = vshrl.u32 %v72, 16
    %v81 = vshrl.u32 %v73, 16
    %v82 = vshrl.u32 %v74, 16
    %v83 = vxor.u32 %v67, %v75
    %v84 = vxor.u32 %v68, %v76
    %v85 = vxor.u32 %v69, %v77
    %v86 = vxor.u32 %v70, %v78
    %v87 = vxor.u32 %v71, %v79
    %v88 = vxor.u32 %v72, %v80
    %v89 = vxor.u32 %v73, %v81
    %v90 = vxor.u32 %v74, %v82
    %v91 = vmul.u32 %v83, 2246822507
    %v92 = vmul.u32 %v84, 2246822507
    %v93 = vmul.u32 %v85, 2246822507
    %v94 = vmul.u32 %v86, 2246822507
    %v95 = vmul.u32 %v87, 2246822507
    %v96 = vmul.u32 %v88, 2246822507
    %v97 = vmul.u32 %v89, 2246822507
    %v98 = vmul.u32 %v90, 2246822507
    %v99 = vshrl.u32 %v91, 13
    %v100 = vshrl.u32 %v92, 13
    %v101 = vshrl.u32 %v93, 13
    %v102 = vshrl.u32 %v94, 13
    %v103 = vshrl.u32 %v95, 13
    %v104 = vshrl.u32 %v96, 13
    %v105 = vshrl.u32 %v97, 13
    %v106 = vshrl.u32 %v98, 13
    %v107 = vxor.u32 %v91, %v99
    %v108 = vxor.u32 %v92, %v100
    %v109 = vxor.u32 %v93, %v101
    %v110 = vxor.u32 %v94, %v102
    %v111 = vxor.u32 %v95, %v103
    %v112 = vxor.u32 %v96, %v104
    %v113 = vxor.u32 %v97, %v105
    %v114 = vxor.u32 %v98, %v106
    %v115 = vmul.u32 %v107, 3266489909
    %v116 = vmul.u32 %v108, 3266489909
    %v117 = vmul.u32 %v109, 3266489909
    %v118 = vmul.u32 %v110, 3266489909
    %v119 = vmul.u32 %v111, 3266489909
    %v120 = vmul.u32 %v112, 3266489909
    %v121 = vmul.u32 %v113, 3266489909
    %v122 = vmul.u32 %v114, 3266489909
    %v123 = vshrl.u32 %v115, 16
    %v124 = vshrl.u32 %v116, 16
    %v125 = vshrl.u32 %v117, 16
    %v126 = vshrl.u32 %v118, 16
    %v127 = vshrl.u32 %v119, 16
    %v128 = vshrl.u32 %v120, 16
    %v129 = vshrl.u32 %v121, 16
    %v130 = vshrl.u32 %v122, 16
    %v131 = vxor.u32 %v115, %v123
    %v132 = vxor.u32 %v116, %v124
    %v133 = vxor.u32 %v117, %v125
    %v134 = vxor.u32 %v118, %v126
    %v135 = vxor.u32 %v119, %v127
    %v136 = vxor.u32 %v120, %v128
    %v137 = vxor.u32 %v121, %v129
    %v138 = vxor.u32 %v122, %v130
    %vm139 = vcmp.lt.u32.totalorder %v131, 2147483648
    %vm140 = vcmp.lt.u32.totalorder %v132, 2147483648
    %vm141 = vcmp.lt.u32.totalorder %v133, 2147483648
    %vm142 = vcmp.lt.u32.totalorder %v134, 2147483648
    %vm143 = vcmp.lt.u32.totalorder %v135, 2147483648
    %vm144 = vcmp.lt.u32.totalorder %v136, 2147483648
    %vm145 = vcmp.lt.u32.totalorder %v137, 2147483648
    %vm146 = vcmp.lt.u32.totalorder %v138, 2147483648
    %v147 = vld [vmem:[#allocation3] sm:$0xff]
    %v148 = vld [vmem:[#allocation3 + $0x8] sm:$0xff]
    %v149 = vmul.f32 %v147, 2.0
    %v150 = vmul.f32 %v148, 2.0
    %v153 = vcombine.high %v149, %v149
    %v155 = vunpack.c.l.s4 1983009808
    %v156 = vunpack.c.0.s8 %v155
    %v157 = vlaneseq
    %v158 = vshrl.u32 %v157, 7
    %v159 = vsub.s32 %v156, %v158
    %v160 = vrot.slane %v149, %v159
    %v162 = vunpack.c.l.s4 1983009808
    %v163 = vunpack.c.0.s8 %v162
    %v164 = vlaneseq
    %v165 = vshrl.u32 %v164, 7
    %v166 = vsub.s32 %v163, %v165
    %v167 = vrot.slane %v153, %v166
    %v168 = vcombine.high %v160, %v160
    %v169 = vcombine.high %v167, %v167
    %v170 = vcombine.high %v150, %v150
    %v172 = vunpack.c.l.s4 1983009808
    %v173 = vunpack.c.0.s8 %v172
    %v174 = vlaneseq
    %v175 = vshrl.u32 %v174, 7
    %v176 = vsub.s32 %v173, %v175
    %v177 = vrot.slane %v150, %v176
    %v179 = vunpack.c.l.s4 1983009808
    %v180 = vunpack.c.0.s8 %v179
    %v181 = vlaneseq
    %v182 = vshrl.u32 %v181, 7
    %v183 = vsub.s32 %v180, %v182
    %v184 = vrot.slane %v170, %v183
    %v185 = vcombine.high %v177, %v177
    %v186 = vcombine.high %v184, %v184
    %v195 = vsel %vm139, %v160, 0.0
    %v196 = vsel %vm140, %v168, 0.0
    %v197 = vsel %vm141, %v167, 0.0
    %v198 = vsel %vm142, %v169, 0.0
    %v199 = vsel %vm143, %v177, 0.0
    %v200 = vsel %vm144, %v185, 0.0
    %v201 = vsel %vm145, %v184, 0.0
    %v202 = vsel %vm146, %v186, 0.0
    %v211 = vcombine.low %v195, %v196
    %v212 = vcombine.low %v197, %v198
    %v214 = vunpack.c.l.s4 1983009808
    %v215 = vunpack.c.0.s8 %v214
    %v216 = vlaneseq
    %v217 = vshrl.u32 %v216, 7
    %v218 = vsub.s32 %v215, %v217
    %v219 = vrot.slane %v211, %v218
    %v221 = vunpack.c.l.s4 1983009808
    %v222 = vunpack.c.0.s8 %v221
    %v223 = vlaneseq
    %v224 = vshrl.u32 %v223, 7
    %v225 = vsub.s32 %v222, %v224
    %v226 = vrot.slane %v212, %v225
    %v227 = vcombine.low %v219, %v226
    %v228 = vcombine.low %v199, %v200
    %v229 = vcombine.low %v201, %v202
    %v231 = vunpack.c.l.s4 1983009808
    %v232 = vunpack.c.0.s8 %v231
    %v233 = vlaneseq
    %v234 = vshrl.u32 %v233, 7
    %v235 = vsub.s32 %v232, %v234
    %v236 = vrot.slane %v228, %v235
    %v238 = vunpack.c.l.s4 1983009808
    %v239 = vunpack.c.0.s8 %v238
    %v240 = vlaneseq
    %v241 = vshrl.u32 %v240, 7
    %v242 = vsub.s32 %v239, %v241
    %v243 = vrot.slane %v229, %v242
    %v244 = vcombine.low %v236, %v243
    %247 = vst [vmem:[#allocation6] sm:$0xff] %v227
    %248 = vst [vmem:[#allocation6 + $0x8] sm:$0xff] %v244
    // Predicated region
    $region14: #{tpu_custom_call.1} parent=1 // pred_check
      _
    $region15: #{tpu_custom_call.1} parent=1 // pred_check_branch
      %250 = sbr.rel (0) target = $region17
    $region16: #{tpu_custom_call.1} parent=1 // pred_region
      %s252 = ssub.s32 256, 256
      %253 = vsyncadd [#allocation5], %s252
      %s255 = sshll.u32 [#allocation6], 4
      %s256 = int_to_ptr.vmem [resolvable:$true] %s255
      %258 = dma.vmem_to_hbm [thread:$0]  %s256, 256, %s2, [#allocation5]
    $region17: #{tpu_custom_call.1} parent=1 // pred_fallthru
      _
    // Predicated region
    $region18: #{tpu_custom_call.1} parent=1 // pred_check
      _
    $region19: #{tpu_custom_call.1} parent=1 // pred_check_branch
      %260 = sbr.rel (0) target = $region21
    $region20: #{tpu_custom_call.1} parent=1 // pred_region
      %261 = dma.done [#allocation5], 256
    $region21: #{tpu_custom_call.1} parent=1 // pred_fallthru
      _
    %262 = vsyncpa [#allocation4], 1
    %263 = vsyncpa [#allocation5], 1

</llo_original>
